<compile_context>
chip_gen: v7x
topology: tpu7x:2x2x1
jax: 0.10.0
libtpu: 0.0.40
codegen_flags: <defaults>
</compile_context>

<pallas_src>
import functools

import jax
import jax.numpy as jnp
from jax import lax
from jax.experimental import pallas as pl
from jax.experimental.pallas import tpu as pltpu

_SMOOTH = 1.0
_VMEM_LIMIT = 32 * 1024 * 1024            # safe scoped-VMEM request on v5e/v6e/v7x
_PIPELINE_VMEM_BUDGET = 16 * 1024 * 1024  # 2 inputs x 2 pipeline buffers per step


# --------------------------------------------------------------------------
# Path 1: whole problem in one VMEM block (no grid loop, no accumulators).
# --------------------------------------------------------------------------
def _dice_single_block_kernel(pred_ref, tgt_ref, out_ref, *, batch):
    p = pred_ref[...].astype(jnp.float32)
    t = tgt_ref[...].astype(jnp.float32)
    inter = jnp.sum(p * t, axis=1, keepdims=True)   # (B, 1)
    denom = jnp.sum(p + t, axis=1, keepdims=True)   # (B, 1)
    dice = (2.0 * inter + jnp.float32(_SMOOTH)) / (denom + jnp.float32(_SMOOTH))
    out_ref[0, 0] = jnp.float32(1.0) - jnp.sum(dice) / jnp.float32(batch)


# --------------------------------------------------------------------------
# Path 2: lane-major streaming.  Input viewed as (B, R, 128); grid (B, chunks)
# with batch "parallel" (megacore) and chunks "arbitrary" (reduction).
# Per-batch (8, 128) partial sums are accumulated directly in the output
# blocks; the wrapper combines them into the final scalar.
# --------------------------------------------------------------------------
def _dice_partial_kernel(pred_ref, tgt_ref, inter_ref, denom_ref, *, ts, rem):
    k = pl.program_id(1)

    @pl.when(k == 0)
    def _init():
        inter_ref[...] = jnp.zeros_like(inter_ref)
        denom_ref[...] = jnp.zeros_like(denom_ref)

    p = pred_ref[...].astype(jnp.float32)   # (ts, 128), full sublanes
    t = tgt_ref[...].astype(jnp.float32)
    prod = p * t
    ssum = p + t

    def fold(x):
        # (ts,128) -> (ts//8, 8, 128) is a sublane-aligned (free) split; the
        # axis-0 sum is a tree of whole-vreg VPU adds (no XLU in the hot loop).
        return jnp.sum(x.reshape(ts // 8, 8, 128), axis=0)

    if rem:  # ragged last chunk: mask only in the last-step branch
        last = pl.num_programs(1) - 1

        @pl.when(k != last)
        def _accum():
            inter_ref[...] += fold(prod)
            denom_ref[...] += fold(ssum)

        @pl.when(k == last)
        def _accum_masked():
            row = lax.broadcasted_iota(jnp.int32, (ts, 128), 0)
            valid = row < rem
            # select AFTER the multiply/add so OOB garbage cannot leak.
            inter_ref[...] += fold(jnp.where(valid, prod, 0.0))
            denom_ref[...] += fold(jnp.where(valid, ssum, 0.0))
    else:
        inter_ref[...] += fold(prod)
        denom_ref[...] += fold(ssum)


# --------------------------------------------------------------------------
# Path 3: 2-D fallback for F not divisible by 128 (no HBM pad copy).
# Accumulators are (B, 128); lane groups are folded with unrolled VPU adds.
# --------------------------------------------------------------------------
def _dice_tiled_2d_kernel(pred_ref, tgt_ref, out_ref, inter_acc, denom_acc,
                          *, f, tile, batch, needs_mask):
    k = pl.program_id(0)

    @pl.when(k == 0)
    def _init():
        inter_acc[...] = jnp.zeros_like(inter_acc)
        denom_acc[...] = jnp.zeros_like(denom_acc)

    groups = tile // 128

    def accumulate(masked):
        acc_i = inter_acc[...]
        acc_d = denom_acc[...]
        for g in range(groups):                       # static unroll
            p = pred_ref[:, g * 128:(g + 1) * 128].astype(jnp.float32)
            t = tgt_ref[:, g * 128:(g + 1) * 128].astype(jnp.float32)
            prod = p * t
            ssum = p + t
            if masked:
                col = (k * tile + g * 128
                       + lax.broadcasted_iota(jnp.int32, (batch, 128), 1))
                valid = col < f
                prod = jnp.where(valid, prod, 0.0)
                ssum = jnp.where(valid, ssum, 0.0)
            acc_i = acc_i + prod
            acc_d = acc_d + ssum
        inter_acc[...] = acc_i
        denom_acc[...] = acc_d

    if needs_mask:  # mask only compiled into the last-step branch
        last = pl.num_programs(0) - 1

        @pl.when(k != last)
        def _plain():
            accumulate(False)

        @pl.when(k == last)
        def _masked():
            accumulate(True)
    else:
        accumulate(False)

    @pl.when(k == pl.num_programs(0) - 1)
    def _finalize():
        inter = jnp.sum(inter_acc[...], axis=1, keepdims=True)   # (B, 1)
        denom = jnp.sum(denom_acc[...], axis=1, keepdims=True)   # (B, 1)
        dice = (2.0 * inter + jnp.float32(_SMOOTH)) / (denom + jnp.float32(_SMOOTH))
        out_ref[0, 0] = jnp.float32(1.0) - jnp.sum(dice) / jnp.float32(batch)


# --------------------------------------------------------------------------
# Wrapper
# --------------------------------------------------------------------------
@functools.partial(jax.jit, static_argnames=("max_tile", "max_block_rows",
                                              "single_block_limit_bytes"))
def dice_loss(pred, target, *, max_tile=4096, max_block_rows=8192,
              single_block_limit_bytes=8 * 1024 * 1024):
    """Equivalent of DiceLoss().forward(pred, target) (smooth = 1)."""
    b = pred.shape[0]
    # No dtype cast / pad here: keep HBM traffic at native width; cast on-chip.
    pred_flat = pred.reshape(b, -1)
    target_flat = target.reshape(b, -1)
    f = pred_flat.shape[1]

    p_item = jnp.dtype(pred_flat.dtype).itemsize
    t_item = jnp.dtype(target_flat.dtype).itemsize
    b_pad = ((b + 7) // 8) * 8                    # sublane padding of a (b, f) block
    padded_in_bytes = b_pad * f * (p_item + t_item)

    # ---------------- Path 1: single-block fast path ----------------
    if padded_in_bytes <= single_block_limit_bytes or f < 128:
        out = pl.pallas_call(
            functools.partial(_dice_single_block_kernel, batch=b),
            out_shape=jax.ShapeDtypeStruct((1, 1), jnp.float32),
            grid_spec=pltpu.PrefetchScalarGridSpec(
                num_scalar_prefetch=0,
                grid=(1,),
                in_specs=[pl.BlockSpec((b, f), lambda k: (0, 0)),
                          pl.BlockSpec((b, f), lambda k: (0, 0))],
                out_specs=pl.BlockSpec(memory_space=pltpu.SMEM),
            ),
            compiler_params=pltpu.CompilerParams(
                dimension_semantics=("arbitrary",),
                vmem_limit_bytes=_VMEM_LIMIT),
        )(pred_flat, target_flat)
        return out[0, 0]

    rows = f // 128

    # ---------------- Path 2: lane-major streaming (F % 128 == 0) ----------------
    if f % 128 == 0 and rows >= 8:
        # 2 inputs x 2 pipeline buffers x (ts,128) blocks within the budget.
        ts = _PIPELINE_VMEM_BUDGET // (2 * 128 * (p_item + t_item))
        ts = min(ts, max_block_rows, rows)
        ts = max(8, (ts // 8) * 8)
        n_chunks = (rows + ts - 1) // ts
        rem = rows % ts

        pred3 = pred_flat.reshape(b, rows, 128)      # layout-compatible view
        tgt3 = target_flat.reshape(b, rows, 128)

        inter_p, denom_p = pl.pallas_call(
            functools.partial(_dice_partial_kernel, ts=ts, rem=rem),
            out_shape=(jax.ShapeDtypeStruct((b, 8, 128), jnp.float32),
                       jax.ShapeDtypeStruct((b, 8, 128), jnp.float32)),
            grid_spec=pltpu.PrefetchScalarGridSpec(
                num_scalar_prefetch=0,
                grid=(b, n_chunks),
                in_specs=[
                    pl.BlockSpec((None, ts, 128), lambda i, k: (i, k, 0)),
                    pl.BlockSpec((None, ts, 128), lambda i, k: (i, k, 0)),
                ],
                out_specs=[
                    pl.BlockSpec((None, 8, 128), lambda i, k: (i, 0, 0)),
                    pl.BlockSpec((None, 8, 128), lambda i, k: (i, 0, 0)),
                ],
            ),
            compiler_params=pltpu.CompilerParams(
                dimension_semantics=("parallel", "arbitrary"),
                vmem_limit_bytes=_VMEM_LIMIT),
        )(pred3, tgt3)

        inter = jnp.sum(inter_p, axis=(1, 2))        # (B,) — tiny wrapper combine
        denom = jnp.sum(denom_p, axis=(1, 2))
        dice = (2.0 * inter + jnp.float32(_SMOOTH)) / (denom + jnp.float32(_SMOOTH))
        return jnp.float32(1.0) - jnp.sum(dice) / jnp.float32(b)

    # ---------------- Path 3: 2-D fallback (ragged F) ----------------
    f_lanes = (f // 128) * 128
    tile_cap = _PIPELINE_VMEM_BUDGET // (2 * b_pad * (p_item + t_item))
    tile = min(max_tile, f_lanes, max(128, tile_cap))
    tile = max(128, (tile // 128) * 128)
    n_chunks = (f + tile - 1) // tile
    needs_mask = (f % tile) != 0

    out = pl.pallas_call(
        functools.partial(_dice_tiled_2d_kernel, f=f, tile=tile, batch=b,
                          needs_mask=needs_mask),
        out_shape=jax.ShapeDtypeStruct((1, 1), jnp.float32),
        grid_spec=pltpu.PrefetchScalarGridSpec(
            num_scalar_prefetch=0,
            grid=(n_chunks,),
            in_specs=[pl.BlockSpec((b, tile), lambda k: (0, k)),
                      pl.BlockSpec((b, tile), lambda k: (0, k))],
            out_specs=pl.BlockSpec(memory_space=pltpu.SMEM),
            scratch_shapes=[pltpu.VMEM((b, 128), jnp.float32),   # intersection
                            pltpu.VMEM((b, 128), jnp.float32)],  # pred + target
        ),
        compiler_params=pltpu.CompilerParams(
            dimension_semantics=("arbitrary",),
            vmem_limit_bytes=_VMEM_LIMIT),
    )(pred_flat, target_flat)
    return out[0, 0]


# --------------------------------------------------------------------------
# Pure-JAX reference
# --------------------------------------------------------------------------
def _dice_loss_ref(pred, target):
    smooth = 1.0
    b = pred.shape[0]
    pred_flat = pred.reshape(b, -1).astype(jnp.float32)
    target_flat = target.reshape(b, -1).astype(jnp.float32)
    intersection = pred_flat * target_flat
    dice_score = (2.0 * intersection.sum(1) + smooth) / (
        pred_flat.sum(1) + target_flat.sum(1) + smooth
    )
    return 1.0 - dice_score.sum() / b


if __name__ == "__main__":
    key = jax.random.PRNGKey(0)
    ks = jax.random.split(key, 6)

    # Case 1: segmentation-style NCHW inputs -> single-block fast path.
    B, C, H, W = 2, 4, 16, 16
    pred1 = jax.nn.sigmoid(jax.random.normal(ks[0], (B, C, H, W), dtype=jnp.float32))
    tgt1 = (jax.random.uniform(ks[1], (B, C, H, W)) > 0.5).astype(jnp.float32)
    l1 = jax.block_until_ready(dice_loss(pred1, tgt1))
    r1 = _dice_loss_ref(pred1, tgt1)
    assert jnp.allclose(l1, r1, atol=1e-5, rtol=1e-5), (l1, r1)

    # Case 2: lane-major streaming path (F = 4*32*32 = 4096, rows = 32),
    # forced tiled with a ragged row-chunk tail (32 % 24 != 0 -> masked branch).
    pred2 = jax.nn.sigmoid(jax.random.normal(ks[2], (2, 4, 32, 32), dtype=jnp.float32))
    tgt2 = (jax.random.uniform(ks[3], (2, 4, 32, 32)) > 0.5).astype(jnp.float32)
    r2 = _dice_loss_ref(pred2, tgt2)
    l2 = jax.block_until_ready(
        dice_loss(pred2, tgt2, max_block_rows=24, single_block_limit_bytes=0))
    assert jnp.allclose(l2, r2, atol=1e-5, rtol=1e-5), (l2, r2)

    # Case 2b: same path, chunks evenly divide rows (no mask branch compiled).
    l2b = jax.block_until_ready(
        dice_loss(pred2, tgt2, max_block_rows=16, single_block_limit_bytes=0))
    assert jnp.allclose(l2b, r2, atol=1e-5, rtol=1e-5), (l2b, r2)

    # Case 3: 2-D fallback path (F = 3*33*37 = 3663, not a multiple of 128),
    # with a ragged (masked) tail tile.
    pred3 = jax.nn.sigmoid(jax.random.normal(ks[4], (2, 3, 33, 37), dtype=jnp.float32))
    tgt3 = (jax.random.uniform(ks[5], (2, 3, 33, 37)) > 0.5).astype(jnp.float32)
    l3 = jax.block_until_ready(
        dice_loss(pred3, tgt3, max_tile=512, single_block_limit_bytes=0))
    r3 = _dice_loss_ref(pred3, tgt3)
    assert jnp.allclose(l3, r3, atol=1e-5, rtol=1e-5), (l3, r3)

    print("KERNEL_OK")
</pallas_src>

<mosaic_0001>
module attributes {stable_mosaic.version = 11 : i64} {
  func.func @_dice_single_block_kernel(%arg0: i32, %arg1: memref<2x1024xf32, #tpu.memory_space<vmem>>, %arg2: memref<2x1024xf32, #tpu.memory_space<vmem>>, %arg3: memref<1x1xf32, #tpu.memory_space<smem>>) attributes {dimension_semantics = [#tpu.dimension_semantics<arbitrary>], iteration_bounds = array<i64: 1>, scalar_prefetch = 0 : i64, scratch_operands = 0 : i64, tpu.core_type = #tpu.core_type<tc>, window_params = [{pipeline_mode = #tpu.pipeline_mode<synchronous>, transform_indices = @transform_0, window_bounds = array<i64: 2, 1024>}, {pipeline_mode = #tpu.pipeline_mode<synchronous>, transform_indices = @transform_1, window_bounds = array<i64: 2, 1024>}, {transform_indices = @transform_2, window_bounds = array<i64: 1, 1>}]} {
    %c0 = arith.constant 0 : index
    %c0_0 = arith.constant 0 : index
    %0 = vector.load %arg1[%c0, %c0_0] : memref<2x1024xf32, #tpu.memory_space<vmem>>, vector<2x1024xf32>
    %c0_1 = arith.constant 0 : index
    %c0_2 = arith.constant 0 : index
    %1 = vector.load %arg2[%c0_1, %c0_2] : memref<2x1024xf32, #tpu.memory_space<vmem>>, vector<2x1024xf32>
    %2 = arith.mulf %0, %1 : vector<2x1024xf32>
    %cst = arith.constant dense<0.000000e+00> : vector<2xf32>
    %3 = vector.multi_reduction <add>, %2, %cst [1] : vector<2x1024xf32> to vector<2xf32>
    %4 = vector.shape_cast %3 : vector<2xf32> to vector<2x1xf32>
    %5 = arith.addf %0, %1 : vector<2x1024xf32>
    %cst_3 = arith.constant dense<0.000000e+00> : vector<2xf32>
    %6 = vector.multi_reduction <add>, %5, %cst_3 [1] : vector<2x1024xf32> to vector<2xf32>
    %7 = vector.shape_cast %6 : vector<2xf32> to vector<2x1xf32>
    %cst_4 = arith.constant 2.000000e+00 : f32
    %8 = vector.broadcast %cst_4 : f32 to vector<2x1xf32>
    %9 = arith.mulf %8, %4 : vector<2x1xf32>
    %cst_5 = arith.constant 1.000000e+00 : f32
    %10 = vector.broadcast %cst_5 : f32 to vector<2x1xf32>
    %11 = arith.addf %9, %10 : vector<2x1xf32>
    %cst_6 = arith.constant 1.000000e+00 : f32
    %12 = vector.broadcast %cst_6 : f32 to vector<2x1xf32>
    %13 = arith.addf %7, %12 : vector<2x1xf32>
    %14 = arith.divf %11, %13 : vector<2x1xf32>
    %15 = vector.shape_cast %14 : vector<2x1xf32> to vector<1x2x1xf32>
    %cst_7 = arith.constant dense<0.000000e+00> : vector<1xf32>
    %16 = vector.multi_reduction <add>, %15, %cst_7 [1, 2] : vector<1x2x1xf32> to vector<1xf32>
    %17 = vector.shape_cast %16 : vector<1xf32> to vector<1x1x1xf32>
    %18 = vector.extract %17[0, 0, 0] : f32 from vector<1x1x1xf32>
    %cst_8 = arith.constant 2.000000e+00 : f32
    %19 = arith.divf %18, %cst_8 : f32
    %cst_9 = arith.constant 1.000000e+00 : f32
    %20 = arith.subf %cst_9, %19 : f32
    %c0_10 = arith.constant 0 : index
    %c0_11 = arith.constant 0 : index
    %21 = memref.load %arg3[%c0_10, %c0_11] : memref<1x1xf32, #tpu.memory_space<smem>>
    memref.store %20, %arg3[%c0_10, %c0_11] : memref<1x1xf32, #tpu.memory_space<smem>>
    return
  }
  func.func @transform_0(%arg0: i32) -> (i32, i32) {
    %c0_i32 = arith.constant 0 : i32
    %c0_i32_0 = arith.constant 0 : i32
    %c0_i32_1 = arith.constant 0 : i32
    return %c0_i32, %c0_i32_0 : i32, i32
  }
  func.func @transform_1(%arg0: i32) -> (i32, i32) {
    %c0_i32 = arith.constant 0 : i32
    %c0_i32_0 = arith.constant 0 : i32
    %c0_i32_1 = arith.constant 0 : i32
    return %c0_i32, %c0_i32_0 : i32, i32
  }
  func.func @transform_2(%arg0: i32) -> (i32, i32) {
    %c0_i32 = arith.constant 0 : i32
    %c0_i32_0 = arith.constant 0 : i32
    %c0_i32_1 = arith.constant 0 : i32
    return %c0_i32, %c0_i32_0 : i32, i32
  }
}

</mosaic_0001>

<llo_original>
// kernel: dice_loss.1
$region0: #{dice_loss.1}
  #allocation0 [shape = 'u32[]', space=smem, size = 0x4, offset = 0x4, fixed_abs, tag = 'smem constant byte address 0x4 - core index']
  #allocation1 [shape = 'u32[144,128]{1,0:T(1,128)}', space=vmem, size = 0x12000, scoped, tag = 'internal scratch']
  %s0 = inlined_call_operand.vmem [shape: f32[2,1024], index: 0, kind: input, shape index: {}]
  %s1 = inlined_call_operand.vmem [shape: f32[2,1024], index: 1, kind: input, shape index: {}]
  %s2 = inlined_call_operand.hbm [shape: f32[1,1], index: 2, kind: output, shape index: {}]
  %s3 = sld [smem:[#allocation0]]
  $region18: #{dice_loss.1} parent=0
    _
  %s5 = ssub.s32 1, %s3
  %s6 = scalar_select 0, %s5, %s3
  $region1: #{dice_loss.1} parent=0
    #allocation2 [shape = 'u8[512]{0}', space=smem, size = 0x200, scoped, tag = 'output window, operand 0, single buffered']
    #allocation3 [shape = 's32[1]{0}', space=sflag, size = 0x4, scoped, tag = 'scoped memory for dice_loss.1']
    %7 = vsyncpa [#allocation3], 0
    // Predicated region
    $region2: #{dice_loss.1} parent=1 // pred_check
      _
    $region3: #{dice_loss.1} parent=1 // pred_check_branch
      %9 = sbr.rel (0) target = $region5
    $region4: #{dice_loss.1} parent=1 // pred_region
      _
    $region5: #{dice_loss.1} parent=1 // pred_fallthru
      _
    // Predicated region
    $region6: #{dice_loss.1} parent=1 // pred_check
      _
    $region7: #{dice_loss.1} parent=1 // pred_check_branch
      %11 = sbr.rel (0) target = $region9
    $region8: #{dice_loss.1} parent=1 // pred_region
      _
    $region9: #{dice_loss.1} parent=1 // pred_fallthru
      _
    %v12 = vld [vmem:[%s0] sm:$0xff]
    %v13 = vld [vmem:[%s0 + $0x8] sm:$0xff]
    %v14 = vld [vmem:[%s1] sm:$0xff]
    %v15 = vld [vmem:[%s1 + $0x8] sm:$0xff]
    %v16 = vmul.f32 %v12, %v14
    %v17 = vmul.f32 %v13, %v15
    %v20 = vcombine.high %v16, %v16
    %v22 = vunpack.c.l.s4 1983009808
    %v23 = vunpack.c.0.s8 %v22
    %v24 = vlaneseq
    %v25 = vshrl.u32 %v24, 7
    %v26 = vsub.s32 %v23, %v25
    %v27 = vrot.slane %v16, %v26
    %v29 = vunpack.c.l.s4 1983009808
    %v30 = vunpack.c.0.s8 %v29
    %v31 = vlaneseq
    %v32 = vshrl.u32 %v31, 7
    %v33 = vsub.s32 %v30, %v32
    %v34 = vrot.slane %v20, %v33
    %v35 = vcombine.high %v27, %v27
    %v36 = vcombine.high %v34, %v34
    %v37 = vcombine.high %v17, %v17
    %v39 = vunpack.c.l.s4 1983009808
    %v40 = vunpack.c.0.s8 %v39
    %v41 = vlaneseq
    %v42 = vshrl.u32 %v41, 7
    %v43 = vsub.s32 %v40, %v42
    %v44 = vrot.slane %v17, %v43
    %v46 = vunpack.c.l.s4 1983009808
    %v47 = vunpack.c.0.s8 %v46
    %v48 = vlaneseq
    %v49 = vshrl.u32 %v48, 7
    %v50 = vsub.s32 %v47, %v49
    %v51 = vrot.slane %v37, %v50
    %v52 = vcombine.high %v44, %v44
    %v53 = vcombine.high %v51, %v51
    %vm62 = vcmask 1041408
    %v63 = vsel %vm62, %v27, 0.0
    %v64 = vsel %vm62, %v35, 0.0
    %v65 = vadd.f32 %v63, %v64
    %v66 = vsel %vm62, %v34, 0.0
    %v67 = vadd.f32 %v65, %v66
    %v68 = vsel %vm62, %v36, 0.0
    %v69 = vadd.f32 %v67, %v68
    %v70 = vsel %vm62, %v44, 0.0
    %v71 = vadd.f32 %v69, %v70
    %v72 = vsel %vm62, %v52, 0.0
    %v73 = vadd.f32 %v71, %v72
    %v74 = vsel %vm62, %v51, 0.0
    %v75 = vadd.f32 %v73, %v74
    %v76 = vsel %vm62, %v53, 0.0
    %v77 = vadd.f32 %v75, %v76
    %78 = vadd.xlane.f32.xlu0 %v77
    %v79 = vpop.xlane.xlu0 %78
    %v80 = vadd.f32 %v12, %v14
    %v81 = vadd.f32 %v13, %v15
    %v84 = vcombine.high %v80, %v80
    %v86 = vunpack.c.l.s4 1983009808
    %v87 = vunpack.c.0.s8 %v86
    %v88 = vlaneseq
    %v89 = vshrl.u32 %v88, 7
    %v90 = vsub.s32 %v87, %v89
    %v91 = vrot.slane %v80, %v90
    %v93 = vunpack.c.l.s4 1983009808
    %v94 = vunpack.c.0.s8 %v93
    %v95 = vlaneseq
    %v96 = vshrl.u32 %v95, 7
    %v97 = vsub.s32 %v94, %v96
    %v98 = vrot.slane %v84, %v97
    %v99 = vcombine.high %v91, %v91
    %v100 = vcombine.high %v98, %v98
    %v101 = vcombine.high %v81, %v81
    %v103 = vunpack.c.l.s4 1983009808
    %v104 = vunpack.c.0.s8 %v103
    %v105 = vlaneseq
    %v106 = vshrl.u32 %v105, 7
    %v107 = vsub.s32 %v104, %v106
    %v108 = vrot.slane %v81, %v107
    %v110 = vunpack.c.l.s4 1983009808
    %v111 = vunpack.c.0.s8 %v110
    %v112 = vlaneseq
    %v113 = vshrl.u32 %v112, 7
    %v114 = vsub.s32 %v111, %v113
    %v115 = vrot.slane %v101, %v114
    %v116 = vcombine.high %v108, %v108
    %v117 = vcombine.high %v115, %v115
    %v126 = vsel %vm62, %v91, 0.0
    %v127 = vsel %vm62, %v99, 0.0
    %v128 = vadd.f32 %v126, %v127
    %v129 = vsel %vm62, %v98, 0.0
    %v130 = vadd.f32 %v128, %v129
    %v131 = vsel %vm62, %v100, 0.0
    %v132 = vadd.f32 %v130, %v131
    %v133 = vsel %vm62, %v108, 0.0
    %v134 = vadd.f32 %v132, %v133
    %v135 = vsel %vm62, %v116, 0.0
    %v136 = vadd.f32 %v134, %v135
    %v137 = vsel %vm62, %v115, 0.0
    %v138 = vadd.f32 %v136, %v137
    %v139 = vsel %vm62, %v117, 0.0
    %v140 = vadd.f32 %v138, %v139
    %141 = vadd.xlane.f32.xlu0 %v140
    %v142 = vpop.xlane.xlu0 %141
    %v143 = vmul.f32 %v79, 2.0
    %v144 = vadd.f32 %v143, 1.0
    %v145 = vadd.f32 %v142, 1.0
    %v146 = vrcp.pop %v145
    %v147 = vmul.f32 %v144, %v146
    %vm148 = vcmask 1024
    %v149 = vsel %vm148, %v147, 0.0
    %150 = vadd.xlane.f32.xlu0 %v149
    %v151 = vpop.xlane.xlu0 %150
    %v152 = vrot.slane %v151, 4
    %v153 = vadd.f32 %v151, %v152
    %v154 = vrot.slane %v153, 2
    %v155 = vadd.f32 %v153, %v154
    %v156 = vrot.slane %v155, 1
    %v157 = vadd.f32 %v155, %v156
    %s158 = vtos %v157
    %v159 = vrcp.pop 2.0
    %s160 = vtos %v159
    %s161 = smul.f32 %s158, %s160
    %s162 = ssub.f32 1.0, %s161
    %s163 = scalar_lea.smem [#allocation2], 0
    %164 = sst [smem:[%s163]] %s162
    // Predicated region
    $region10: #{dice_loss.1} parent=1 // pred_check
      _
    $region11: #{dice_loss.1} parent=1 // pred_check_branch
      %166 = sbr.rel (0) target = $region13
    $region12: #{dice_loss.1} parent=1 // pred_region
      %s168 = ssub.s32 16, 16
      %169 = vsyncadd [#allocation3], %s168
      %172 = dma.smem_to_hbm [#allocation2], 16, %s2, [#allocation3]
    $region13: #{dice_loss.1} parent=1 // pred_fallthru
      _
    // Predicated region
    $region14: #{dice_loss.1} parent=1 // pred_check
      _
    $region15: #{dice_loss.1} parent=1 // pred_check_branch
      %174 = sbr.rel (0) target = $region17
    $region16: #{dice_loss.1} parent=1 // pred_region
      %175 = dma.done [#allocation3], 16
    $region17: #{dice_loss.1} parent=1 // pred_fallthru
      _
    %176 = sfence
    %177 = vsyncpa [#allocation3], 1

</llo_original>
